<compile_context>
chip_gen: v7x
topology: tpu7x:2x2x1
jax: 0.10.0
libtpu: 0.0.40
codegen_flags: <defaults>
</compile_context>

<pallas_src>
import functools

import jax
import jax.numpy as jnp
import numpy as np
from jax.experimental import pallas as pl
from jax.experimental.pallas import tpu as pltpu

K = 7          # conv kernel size
PAD = 3        # conv padding


# --------------------------------------------------------------------------
# helpers
# --------------------------------------------------------------------------
def _round_up(v, m):
    return -(-v // m) * m


def _padded_bytes(shape, itemsize):
    """VMEM footprint of one buffer after (8, 128) tile padding."""
    s = list(shape)
    if len(s) >= 1:
        s[-1] = _round_up(s[-1], 128)
    if len(s) >= 2:
        s[-2] = _round_up(s[-2], 8)
    n = 1
    for d in s:
        n *= d
    return n * itemsize


def _vmem_limit_bytes(double_buffered, scratch):
    """Derive vmem_limit from actual block/scratch sizes (review item)."""
    need = sum(2 * _padded_bytes(s, isz) for s, isz in double_buffered)
    need += sum(_padded_bytes(s, isz) for s, isz in scratch)
    need += 2 * 1024 * 1024                       # compiler-internal headroom
    try:
        cap = int(pltpu.get_tpu_info().vmem_capacity_bytes)
    except Exception:
        cap = 64 * 1024 * 1024                    # conservative (v7x physical)
    return int(min(max(need, 16 * 1024 * 1024), (cap * 9) // 10))


def _choose_tile_rows(H, W, C, itemsize,
                      target_rows=32, block_budget_bytes=2 * 1024 * 1024):
    """Row-slab height TH: divides H, keeps the lane-dense block TH*W a
    multiple of 128 (full-lane unmasked stores), and keeps the per-buffer
    x/out block within a small VMEM budget so 2x(in+out)+scratch fits easily
    on v7x (64 MiB) and leaves room for deeper buffering on v5e/v6e."""
    cands = [th for th in range(1, H + 1)
             if H % th == 0 and (th * W) % 128 == 0
             and C * th * W * itemsize <= block_budget_bytes]
    if not cands:
        return H          # whole image per step (last dim == full HW is legal)
    return min(cands, key=lambda th: (abs(th - target_rows), -th))


# --------------------------------------------------------------------------
# pass 1: channel reduce (sum, max) on lane-dense row slabs
# --------------------------------------------------------------------------
def _reduce_kernel(x_ref, red_ref, *, C):
    """x_ref: (C, TB) native dtype;  red_ref: (2, TB) f32  [row 0 = sum, 1 = max]."""
    x = x_ref[...]                                            # no f32 copy of x
    if C >= 8:
        # channel sum on the MXU (frees the VALU slot), f32 accumulation
        ones = jnp.ones((1, C), dtype=x.dtype)
        s = jax.lax.dot_general(
            ones, x, (((1,), (0,)), ((), ())),
            preferred_element_type=jnp.float32,
            precision=jax.lax.Precision.HIGHEST)              # (1, TB)
    else:
        s = jnp.sum(x.astype(jnp.float32), axis=0, keepdims=True)
    m = jnp.max(x, axis=0, keepdims=True).astype(jnp.float32)  # (1, TB)
    red_ref[0:1, :] = s
    red_ref[1:2, :] = m


# --------------------------------------------------------------------------
# pass 2: 7x7 conv on padded [sum, max] maps + broadcast multiply with x
# --------------------------------------------------------------------------
def _conv_mul_kernel(w_ref, b_ref, redp_ref, x_ref, o_ref,
                     shift_ref, attf_ref, *, TH, W):
    """
    w_ref    : SMEM (2*K*K,)        [avg taps (pre-scaled by 1/C) | max taps]
    b_ref    : SMEM (1,)            conv bias
    redp_ref : VMEM (2, H+6, W+6)   zero-padded [sum, max] maps (whole image)
    x_ref    : VMEM (C, TH*W)       lane-dense input slab
    o_ref    : VMEM (C, TH*W)       lane-dense output slab
    shift_ref: VMEM (2, K, TH+6, W) horizontally pre-shifted halo windows
    attf_ref : VMEM (1, TH*W)       flattened attention slab
    """
    r = pl.program_id(1)
    ra = r * TH                      # first padded row of this slab's window
    HALO = TH + 2 * PAD

    # Hoist the 7 horizontal (lane) shifts per map: 14 lane ops per step; the
    # 98 conv tap reads below are then plain sublane-offset vector loads.
    for dx in range(K):
        shift_ref[0, dx] = redp_ref[0, pl.ds(ra, HALO), pl.ds(dx, W)]
        shift_ref[1, dx] = redp_ref[1, pl.ds(ra, HALO), pl.ds(dx, W)]

    # 7x7 conv over the slab: 4 independent row-tiled (TH, W) accumulators
    # (a few vregs each -> no accumulator spill traffic).
    accs = [jnp.zeros((TH, W), jnp.float32) for _ in range(4)]
    t = 0
    for dy in range(K):
        for dx in range(K):
            wa = w_ref[dy * K + dx]
            wm = w_ref[K * K + dy * K + dx]
            accs[t % 4] = accs[t % 4] + wa * shift_ref[0, dx, dy:dy + TH, :]
            accs[(t + 1) % 4] = accs[(t + 1) % 4] + wm * shift_ref[1, dx, dy:dy + TH, :]
            t += 2
    att = ((accs[0] + accs[1]) + (accs[2] + accs[3])) + b_ref[0]   # (TH, W)

    # Flatten att back into the lane-dense layout (TH small row stores).
    for y in range(TH):
        attf_ref[:, y * W:(y + 1) * W] = att[y:y + 1, :]

    # Lane-dense broadcast multiply; single dense store.  att is cast once to
    # the input dtype so bf16 inputs multiply in bf16 on v6e/v7x.
    xv = x_ref[...]
    o_ref[...] = (xv * attf_ref[...].astype(xv.dtype)).astype(o_ref.dtype)


# --------------------------------------------------------------------------
# wrapper
# --------------------------------------------------------------------------
def spatial_attention(x, weight, bias, *, tile_rows=None):
    """x: (N, C, H, W); weight: (1, 2, 7, 7); bias: (1,)."""
    N, C, H, W = x.shape
    HW = H * W
    Hp, Wp = H + 2 * PAD, W + 2 * PAD
    itemsize = jnp.dtype(x.dtype).itemsize

    if tile_rows is None:
        TH = _choose_tile_rows(H, W, C, itemsize)
    else:
        TH = int(tile_rows)
        if H % TH != 0 or (TH != H and (TH * W) % 128 != 0):
            raise ValueError("tile_rows must divide H and give TH*W % 128 == 0")
    num_slabs = H // TH
    TB = TH * W

    # Free reshape of contiguous NCHW -> lane-dense last dim.
    xf = x.reshape(N, C, HW)

    # Fold 1/C into the avg-branch weights; flatten as [avg taps | max taps].
    w_avg = (weight[0, 0].astype(jnp.float32) / C).reshape(-1)
    w_max = weight[0, 1].astype(jnp.float32).reshape(-1)
    w_flat = jnp.concatenate([w_avg, w_max])                   # (2*K*K,)
    b_flat = bias.reshape(-1).astype(jnp.float32)              # (1,)

    # ---------------- pass 1: channel reduce ----------------
    vmem1 = _vmem_limit_bytes(
        double_buffered=[((C, TB), itemsize), ((2, TB), 4)],
        scratch=[])
    red = pl.pallas_call(
        functools.partial(_reduce_kernel, C=C),
        out_shape=jax.ShapeDtypeStruct((N, 2, HW), jnp.float32),
        grid_spec=pltpu.PrefetchScalarGridSpec(
            num_scalar_prefetch=0,
            grid=(N, num_slabs),
            in_specs=[
                pl.BlockSpec((pl.Squeezed(), C, TB), lambda n, r: (n, 0, r)),
            ],
            out_specs=pl.BlockSpec((pl.Squeezed(), 2, TB), lambda n, r: (n, 0, r)),
        ),
        compiler_params=pltpu.CompilerParams(
            dimension_semantics=("parallel", "parallel"),
            vmem_limit_bytes=vmem1,
        ),
    )(xf)

    # Zero-pad only the tiny reduced maps (rows and cols) in plain XLA.
    redp = jnp.pad(red.reshape(N, 2, H, W),
                   ((0, 0), (0, 0), (PAD, PAD), (PAD, PAD)))   # (N, 2, Hp, Wp)

    # ---------------- pass 2: conv + broadcast multiply ----------------
    vmem2 = _vmem_limit_bytes(
        double_buffered=[((2, Hp, Wp), 4), ((C, TB), itemsize), ((C, TB), itemsize)],
        scratch=[((2, K, TH + 2 * PAD, W), 4), ((1, TB), 4)])
    out = pl.pallas_call(
        functools.partial(_conv_mul_kernel, TH=TH, W=W),
        out_shape=jax.ShapeDtypeStruct((N, C, HW), x.dtype),
        grid_spec=pltpu.PrefetchScalarGridSpec(
            num_scalar_prefetch=0,
            grid=(N, num_slabs),
            in_specs=[
                pl.BlockSpec(memory_space=pltpu.MemorySpace.SMEM),      # weights
                pl.BlockSpec(memory_space=pltpu.MemorySpace.SMEM),      # bias
                pl.BlockSpec((pl.Squeezed(), 2, Hp, Wp),
                             lambda n, r: (n, 0, 0, 0)),                # padded maps
                pl.BlockSpec((pl.Squeezed(), C, TB),
                             lambda n, r: (n, 0, r)),                   # x slab
            ],
            out_specs=pl.BlockSpec((pl.Squeezed(), C, TB),
                                   lambda n, r: (n, 0, r)),
            scratch_shapes=[
                pltpu.VMEM((2, K, TH + 2 * PAD, W), jnp.float32),       # shifted maps
                pltpu.VMEM((1, TB), jnp.float32),                       # flattened att
            ],
        ),
        compiler_params=pltpu.CompilerParams(
            dimension_semantics=("parallel", "parallel"),
            vmem_limit_bytes=vmem2,
        ),
    )(w_flat, b_flat, redp, xf)

    return out.reshape(N, C, H, W)


# --------------------------------------------------------------------------
# pure-JAX reference mirroring the PyTorch module
# --------------------------------------------------------------------------
def reference_forward(x, weight, bias):
    avg = jnp.mean(x, axis=1, keepdims=True)
    mx = jnp.max(x, axis=1, keepdims=True)
    cat = jnp.concatenate([avg, mx], axis=1)
    conv = jax.lax.conv_general_dilated(
        cat, weight, window_strides=(1, 1), padding=[(PAD, PAD), (PAD, PAD)],
        dimension_numbers=("NCHW", "OIHW", "NCHW"))
    conv = conv + bias.reshape(1, 1, 1, 1)
    return conv * x


if __name__ == "__main__":
    key = jax.random.PRNGKey(0)
    kx, kw, kb, kx2 = jax.random.split(key, 4)

    # Deterministic Conv2d(2, 1, 7, padding=3) params (PyTorch-style fan-in init).
    fan_in = 2 * K * K
    bound = 1.0 / np.sqrt(fan_in)
    weight = jax.random.uniform(kw, (1, 2, K, K), jnp.float32, -bound, bound)
    bias = jax.random.uniform(kb, (1,), jnp.float32, -bound, bound)

    # Primary shape from the module spec (small).
    N, C, H, W = 2, 4, 16, 16
    x = jax.random.normal(kx, (N, C, H, W), dtype=jnp.float32)
    out = jax.block_until_ready(spatial_attention(x, weight, bias))
    ref = reference_forward(x, weight, bias)
    np.testing.assert_allclose(np.asarray(out), np.asarray(ref),
                               rtol=1e-4, atol=1e-5)

    # Secondary shape: forces the multi-slab halo path (4 row slabs) and the
    # MXU channel-sum path (C >= 8).
    N2, C2, H2, W2 = 1, 16, 32, 16
    x2 = jax.random.normal(kx2, (N2, C2, H2, W2), dtype=jnp.float32)
    out2 = jax.block_until_ready(spatial_attention(x2, weight, bias, tile_rows=8))
    ref2 = reference_forward(x2, weight, bias)
    np.testing.assert_allclose(np.asarray(out2), np.asarray(ref2),
                               rtol=5e-3, atol=5e-4)

    print("KERNEL_OK")
</pallas_src>

<mosaic_0001>
module attributes {stable_mosaic.version = 11 : i64} {
  func.func @_reduce_kernel(%arg0: i32, %arg1: i32, %arg2: memref<1x4x256xf32, #tpu.memory_space<vmem>>, %arg3: memref<1x2x256xf32, #tpu.memory_space<vmem>>) attributes {dimension_semantics = [#tpu.dimension_semantics<parallel>, #tpu.dimension_semantics<parallel>], iteration_bounds = array<i64: 2, 1>, scalar_prefetch = 0 : i64, scratch_operands = 0 : i64, tpu.core_type = #tpu.core_type<tc>, window_params = [{transform_indices = @transform_0, window_bounds = array<i64: 1, 4, 256>}, {transform_indices = @transform_1, window_bounds = array<i64: 1, 2, 256>}]} {
    %c0 = arith.constant 0 : index
    %c0_0 = arith.constant 0 : index
    %c0_1 = arith.constant 0 : index
    %0 = vector.load %arg2[%c0, %c0_0, %c0_1] : memref<1x4x256xf32, #tpu.memory_space<vmem>>, vector<1x4x256xf32>
    %1 = vector.shape_cast %0 : vector<1x4x256xf32> to vector<4x256xf32>
    %cst = arith.constant dense<0.000000e+00> : vector<256xf32>
    %2 = vector.multi_reduction <add>, %1, %cst [0] : vector<4x256xf32> to vector<256xf32>
    %3 = vector.shape_cast %2 : vector<256xf32> to vector<1x256xf32>
    %cst_2 = arith.constant dense<0xFF800000> : vector<256xf32>
    %4 = vector.multi_reduction <maximumf>, %1, %cst_2 [0] : vector<4x256xf32> to vector<256xf32>
    %5 = vector.shape_cast %4 : vector<256xf32> to vector<1x256xf32>
    %c0_3 = arith.constant 0 : index
    %c0_4 = arith.constant 0 : index
    %c0_5 = arith.constant 0 : index
    %6 = vector.load %arg3[%c0_3, %c0_4, %c0_5] : memref<1x2x256xf32, #tpu.memory_space<vmem>>, vector<1x1x256xf32>
    %7 = vector.shape_cast %6 : vector<1x1x256xf32> to vector<1x256xf32>
    %8 = vector.shape_cast %3 : vector<1x256xf32> to vector<1x1x256xf32>
    tpu.vector_store %arg3[%c0_3, %c0_4, %c0_5], %8 {strides = array<i32>} : memref<1x2x256xf32, #tpu.memory_space<vmem>>, vector<1x1x256xf32>,
    %c0_6 = arith.constant 0 : index
    %c1 = arith.constant 1 : index
    %c0_7 = arith.constant 0 : index
    %9 = vector.load %arg3[%c0_6, %c1, %c0_7] : memref<1x2x256xf32, #tpu.memory_space<vmem>>, vector<1x1x256xf32>
    %10 = vector.shape_cast %9 : vector<1x1x256xf32> to vector<1x256xf32>
    %11 = vector.shape_cast %5 : vector<1x256xf32> to vector<1x1x256xf32>
    tpu.vector_store %arg3[%c0_6, %c1, %c0_7], %11 {strides = array<i32>} : memref<1x2x256xf32, #tpu.memory_space<vmem>>, vector<1x1x256xf32>,
    return
  }
  func.func @transform_0(%arg0: i32, %arg1: i32) -> (i32, i32, i32) {
    %c0_i32 = arith.constant 0 : i32
    %c0_i32_0 = arith.constant 0 : i32
    return %arg0, %c0_i32, %arg1 : i32, i32, i32
  }
  func.func @transform_1(%arg0: i32, %arg1: i32) -> (i32, i32, i32) {
    %c0_i32 = arith.constant 0 : i32
    %c0_i32_0 = arith.constant 0 : i32
    return %arg0, %c0_i32, %arg1 : i32, i32, i32
  }
}

</mosaic_0001>

<llo_original>
// kernel: tpu_custom_call.1
$region0: #{tpu_custom_call.1}
  #allocation0 [shape = 'u32[]', space=smem, size = 0x4, offset = 0x4, fixed_abs, tag = 'smem constant byte address 0x4 - core index']
  #allocation1 [shape = 'u32[144,128]{1,0:T(1,128)}', space=vmem, size = 0x12000, scoped, tag = 'internal scratch']
  %s0 = inlined_call_operand.hbm [shape: f32[2,4,256], index: 0, kind: input, shape index: {}]
  %s1 = inlined_call_operand.hbm [shape: f32[2,2,256], index: 1, kind: output, shape index: {}]
  %s2 = sld [smem:[#allocation0]]
  $region41: #{tpu_custom_call.1} parent=0
    _
  %s4 = ssub.s32 1, %s2
  %s5 = scalar_select 0, %s4, %s2
  $region1: #{tpu_custom_call.1} parent=0
    #allocation2 [shape = 'u8[8192]{0}', space=vmem, size = 0x2000, scoped, tag = 'input window, operand 0']
    #allocation3 [shape = 's32[2]{0}', space=sflag, size = 0x8, scoped, tag = 'scoped memory for tpu_custom_call.1']
    #allocation4 [shape = 's32[2]{0}', space=sflag, size = 0x8, scoped, tag = 'scoped memory for tpu_custom_call.1']
    #allocation5 [shape = 'u8[4096]{0}', space=vmem, size = 0x1000, scoped, tag = 'output window, operand 0']
    %6 = vsyncpa [#allocation3], 0
    %s7 = scalar_lea.sflag [#allocation3], 1
    %8 = vsyncpa %s7, 0
    %9 = vsyncpa [#allocation4], 0
    %s10 = scalar_lea.sflag [#allocation4], 1
    %11 = vsyncpa %s10, 0
    loop: start=0, step=1, limit=4
    $region2: #{tpu_custom_call.1} parent=1 // loop_pre_header
      _
    $region3: #{tpu_custom_call.1} parent=1 // loop_header
      %s13 = sphi 0, %s17
      %p14 = scmp.ge.s32.totalorder %s13, 4
      %s20 = sphi 0, %s32
      %s21 = sphi 0, %s28
      %s22 = sphi 0, %s20
      %s23 = sphi 0, %s21
      %s24 = sphi 0, %s22
      %s25 = sphi 0, %s23
      %s37 = sphi 0, %s39
      %s40 = sphi 0, %s37
      %s41 = sphi 0, %s40
      %s57 = sphi 0, %s41
      %s65 = sphi 0, %s67
      %s68 = sphi 0, %s65
      %s69 = sphi 0, %s68
      %s85 = sphi 0, %s69
    $region4: #{tpu_custom_call.1} parent=1 // loop_header_branch
      %16 = sbr.rel (%p14) target = $region8
    $region5: #{tpu_custom_call.1} parent=1 // loop_body
      %s18 = ssub.s32 %s13, 1
      %s19 = ssub.s32 %s13, 2
      %s26 = sadd.s32 1, %s21
      %p27 = scmp.ge.s32.totalorder %s26, 1
      %s28 = scalar_select %p27, 0, %s26
      %s29 = sadd.s32 1, %s20
      %s30 = scalar_select %p27, %s29, %s20
      %p31 = scmp.ge.s32.totalorder %s30, 2
      %s32 = scalar_select %p31, 0, %s30
      %s33 = ssub.s32 %s20, %s32
      %s34 = ssub.s32 %s21, %s28
      %s35 = sor.u32 %s33, %s34
      %p36 = scmp.eq.s32.totalorder %s35, 0
      %s38 = sadd.s32 %s37, 1
      %s39 = scalar_select %p36, %s37, %s38
      %p42 = pneg %p36
      %p43 = scmp.eq.s32.totalorder %s13, 1
      %p44 = por %p42, %p43
      %p45 = scmp.ne.s32.totalorder %s37, %s40
      %p46 = scmp.eq.s32.totalorder %s13, 0
      %p47 = por %p45, %p46
      %p48 = scmp.ne.s32.totalorder %s37, %s40
      %p49 = scmp.eq.s32.totalorder %s18, 1
      %p50 = por %p48, %p49
      %p51 = scmp.ne.s32.totalorder %s40, %s41
      %p52 = scmp.eq.s32.totalorder %s18, 0
      %p53 = por %p51, %p52
      %p54 = scmp.ne.s32.totalorder %s40, %s41
      %p55 = scmp.eq.s32.totalorder %s19, 1
      %p56 = por %p54, %p55
      %p58 = scmp.ne.s32.totalorder %s41, %s57
      %p59 = scmp.eq.s32.totalorder %s19, 0
      %p60 = por %p58, %p59
      %s61 = ssub.s32 %s20, %s32
      %s62 = ssub.s32 %s21, %s28
      %s63 = sor.u32 %s61, %s62
      %p64 = scmp.eq.s32.totalorder %s63, 0
      %s66 = sadd.s32 %s65, 1
      %s67 = scalar_select %p64, %s65, %s66
      %p70 = pneg %p64
      %p71 = scmp.eq.s32.totalorder %s13, 1
      %p72 = por %p70, %p71
      %p73 = scmp.ne.s32.totalorder %s65, %s68
      %p74 = scmp.eq.s32.totalorder %s13, 0
      %p75 = por %p73, %p74
      %p76 = scmp.ne.s32.totalorder %s65, %s68
      %p77 = scmp.eq.s32.totalorder %s18, 1
      %p78 = por %p76, %p77
      %p79 = scmp.ne.s32.totalorder %s68, %s69
      %p80 = scmp.eq.s32.totalorder %s18, 0
      %p81 = por %p79, %p80
      %p82 = scmp.ne.s32.totalorder %s68, %s69
      %p83 = scmp.eq.s32.totalorder %s19, 1
      %p84 = por %p82, %p83
      %p86 = scmp.ne.s32.totalorder %s69, %s85
      %p87 = scmp.eq.s32.totalorder %s19, 0
      %p88 = por %p86, %p87
      %p89 = scmp.le.s32.totalorder 1, %s13
      %p90 = scmp.lt.s32.totalorder %s13, 3
      %p91 = pnand %p89, %p90
      %p92 = pneg %p91
      // Predicated region
      $region9: #{tpu_custom_call.1} parent=5 // pred_check
        _
      $region10: #{tpu_custom_call.1} parent=5 // pred_check_branch
        %94 = sbr.rel (%p91) target = $region12
      $region11: #{tpu_custom_call.1} parent=5 // pred_region
        %s95 = ssub.s32 %s13, 1
      $region12: #{tpu_custom_call.1} parent=5 // pred_fallthru
        _
      %p96 = scmp.lt.s32.totalorder %s13, 2
      // Predicated region
      $region13: #{tpu_custom_call.1} parent=5 // pred_check
        %p97 = pneg %p96
      $region14: #{tpu_custom_call.1} parent=5 // pred_check_branch
        %99 = sbr.rel (%p97) target = $region16
      $region15: #{tpu_custom_call.1} parent=5 // pred_region
        // Predicated region
        $region17: #{tpu_custom_call.1} parent=15 // pred_check
          %p100 = pneg %p47
        $region18: #{tpu_custom_call.1} parent=15 // pred_check_branch
          %102 = sbr.rel (%p100) target = $region20
        $region19: #{tpu_custom_call.1} parent=15 // pred_region
          %s103 = sand.u32 %s37, 1
          %s104 = scalar_lea.sflag [#allocation3], %s103
          %s105 = sand.u32 %s37, 1
          %s106 = smul.addr %s105, 8
          %s107 = scalar_lea.vmem [#allocation2], %s106
          %s108 = smul.u32 2, %s21
          %s110 = ssub.s32 128, 128
          %111 = vsyncadd %s104, %s110
          %s112 = smul.addr %s20, 2
          %s113 = sadd.s32 %s108, %s112
          %s114 = smul.addr %s113, 64
          %s115 = scalar_lea.hbm %s0, %s114
          %s117 = sshll.u32 %s107, 4
          %s118 = int_to_ptr.vmem [resolvable:$true] %s117
          %120 = dma.hbm_to_vmem [thread:$0]  %s115, 128, %s118, %s104
        $region20: #{tpu_custom_call.1} parent=15 // pred_fallthru
          _
      $region16: #{tpu_custom_call.1} parent=5 // pred_fallthru
        _
      %p121 = scmp.le.s32.totalorder 1, %s13
      %p122 = scmp.lt.s32.totalorder %s13, 3
      %p123 = pnand %p121, %p122
      %p124 = pneg %p123
      // Predicated region
      $region21: #{tpu_custom_call.1} parent=5 // pred_check
        _
      $region22: #{tpu_custom_call.1} parent=5 // pred_check_branch
        %126 = sbr.rel (%p123) target = $region24
      $region23: #{tpu_custom_call.1} parent=5 // pred_region
        %s127 = ssub.s32 %s13, 1
        %s128 = sand.u32 %s40, 1
        %s129 = scalar_lea.sflag [#allocation3], %s128
        %s130 = sand.u32 %s40, 1
        %s131 = smul.addr %s130, 8
        %s132 = scalar_lea.vmem [#allocation2], %s131
        // Predicated region
        $region25: #{tpu_custom_call.1} parent=23 // pred_check
          %p133 = pneg %p53
        $region26: #{tpu_custom_call.1} parent=23 // pred_check_branch
          %135 = sbr.rel (%p133) target = $region28
        $region27: #{tpu_custom_call.1} parent=23 // pred_region
          %136 = dma.done %s129, 128
        $region28: #{tpu_custom_call.1} parent=23 // pred_fallthru
          _
        %s137 = sand.u32 %s40, 1
        %s138 = scalar_lea.sflag [#allocation3], %s137
        %s139 = sand.u32 %s40, 1
        %s140 = smul.addr %s139, 8
        %s141 = scalar_lea.vmem [#allocation2], %s140
        %p142 = pneg %p53
        %p143 = pneg %p50
        %p144 = pneg %p81
        %p145 = pneg %p78
        %s146 = sand.u32 %s68, 1
        %s147 = scalar_lea.sflag [#allocation4], %s146
        %s148 = sand.u32 %s68, 1
        %s149 = smul.addr %s148, 4
        %s150 = scalar_lea.vmem [#allocation5], %s149
        %s151 = smul.u32 2, %s23
        %s152 = smul.u32 2, %s23
        %v153 = vld [vmem:[%s132] sm:$0xff]
        %v155 = vcombine.high %v153, %v153
        %vm157 = vcmask 1043456
        %v158 = vsel %vm157, %v153, 0.0
        %v159 = vrot.slane %v158, 4
        %v160 = vadd.f32 %v158, %v159
        %v161 = vrot.slane %v160, 2
        %v162 = vadd.f32 %v160, %v161
        %v163 = vrot.slane %v162, 1
        %v164 = vadd.f32 %v162, %v163
        %v165 = vsel %vm157, %v155, 0.0
        %v166 = vrot.slane %v165, 4
        %v167 = vadd.f32 %v165, %v166
        %v168 = vrot.slane %v167, 2
        %v169 = vadd.f32 %v167, %v168
        %v170 = vrot.slane %v169, 1
        %v171 = vadd.f32 %v169, %v170
        %v172 = vsel %vm157, %v153, -inf
        %v173 = vrot.slane %v172, 4
        %v174 = vmax.f32 %v172, %v173
        %v175 = vrot.slane %v174, 2
        %v176 = vmax.f32 %v174, %v175
        %v177 = vrot.slane %v176, 1
        %v178 = vmax.f32 %v176, %v177
        %v179 = vsel %vm157, %v155, -inf
        %v180 = vrot.slane %v179, 4
        %v181 = vmax.f32 %v179, %v180
        %v182 = vrot.slane %v181, 2
        %v183 = vmax.f32 %v181, %v182
        %v184 = vrot.slane %v183, 1
        %v185 = vmax.f32 %v183, %v184
        %v188 = vcombine.low %v164, %v171
        %v190 = vunpack.c.l.s4 1966171168
        %v191 = vunpack.c.0.s8 %v190
        %v192 = vlaneseq
        %v193 = vshrl.u32 %v192, 7
        %v194 = vsub.s32 %v191, %v193
        %v195 = vrot.slane %v188, %v194
        %v197 = vunpack.c.l.s4 1966171168
        %v198 = vunpack.c.0.s8 %v197
        %v199 = vlaneseq
        %v200 = vshrl.u32 %v199, 7
        %v201 = vsub.s32 %v198, %v200
        %v202 = vrot.slane %v195, %v201
        %v204 = vlaneseq
        %vm205 = vcmp.ge.s32.totalorder %v204, 0
        %vm206 = vcmp.lt.s32.totalorder %v204, 256
        %vm207 = vmand %vm205, %vm206
        %208 = vst.msk [vmem:[%s150] ss:$2 sm:$0x3] %vm207, %v202
        %v211 = vcombine.low %v178, %v185
        %v213 = vunpack.c.l.s4 1966171168
        %v214 = vunpack.c.0.s8 %v213
        %v215 = vlaneseq
        %v216 = vshrl.u32 %v215, 7
        %v217 = vsub.s32 %v214, %v216
        %v218 = vrot.slane %v211, %v217
        %v220 = vunpack.c.l.s4 1966171168
        %v221 = vunpack.c.0.s8 %v220
        %v222 = vlaneseq
        %v223 = vshrl.u32 %v222, 7
        %v224 = vsub.s32 %v221, %v223
        %v225 = vrot.slane %v218, %v224
        %s227 = scalar_lea.vmem %s150, 1 [#allocation5]
        %228 = vst.msk [vmem:[%s227] ss:$2 sm:$0x3] %vm207, %v225
        %s229 = sand.u32 %s68, 1
        %s230 = scalar_lea.sflag [#allocation4], %s229
        %s231 = sand.u32 %s68, 1
        %s232 = smul.addr %s231, 4
        %s233 = scalar_lea.vmem [#allocation5], %s232
        // Predicated region
        $region29: #{tpu_custom_call.1} parent=23 // pred_check
          %p234 = pneg %p78
        $region30: #{tpu_custom_call.1} parent=23 // pred_check_branch
          %236 = sbr.rel (%p234) target = $region32
        $region31: #{tpu_custom_call.1} parent=23 // pred_region
          %s237 = smul.u32 2, %s23
          %s239 = ssub.s32 64, 64
          %240 = vsyncadd %s230, %s239
          %s241 = smul.addr %s22, 2
          %s242 = sadd.s32 %s237, %s241
          %s243 = smul.addr %s242, 32
          %s244 = scalar_lea.hbm %s1, %s243
          %s246 = sshll.u32 %s233, 4
          %s247 = int_to_ptr.vmem [resolvable:$true] %s246
          %249 = dma.vmem_to_hbm [thread:$0]  %s247, 64, %s244, %s230
        $region32: #{tpu_custom_call.1} parent=23 // pred_fallthru
          _
      $region24: #{tpu_custom_call.1} parent=5 // pred_fallthru
        _
      %p250 = scmp.le.s32.totalorder 2, %s13
      // Predicated region
      $region33: #{tpu_custom_call.1} parent=5 // pred_check
        %p251 = pneg %p250
      $region34: #{tpu_custom_call.1} parent=5 // pred_check_branch
        %253 = sbr.rel (%p251) target = $region36
      $region35: #{tpu_custom_call.1} parent=5 // pred_region
        %s254 = ssub.s32 %s13, 2
        // Predicated region
        $region37: #{tpu_custom_call.1} parent=35 // pred_check
          %p255 = pneg %p84
        $region38: #{tpu_custom_call.1} parent=35 // pred_check_branch
          %257 = sbr.rel (%p255) target = $region40
        $region39: #{tpu_custom_call.1} parent=35 // pred_region
          %s258 = sand.u32 %s69, 1
          %s259 = scalar_lea.sflag [#allocation4], %s258
          %s260 = sand.u32 %s69, 1
          %s261 = smul.addr %s260, 4
          %s262 = scalar_lea.vmem [#allocation5], %s261
          %263 = dma.done %s259, 64
        $region40: #{tpu_custom_call.1} parent=35 // pred_fallthru
          _
      $region36: #{tpu_custom_call.1} parent=5 // pred_fallthru
        _
    $region6: #{tpu_custom_call.1} parent=1 // loop_footer
      %s17 = sadd.s32 1, %s13
    $region7: #{tpu_custom_call.1} parent=1 // loop_footer_branch
      %12 = sbr.rel target = $region3
    $region8: #{tpu_custom_call.1} parent=1 // loop_exit
      _
    %264 = vsyncpa [#allocation3], 1
    %s265 = scalar_lea.sflag [#allocation3], 1
    %266 = vsyncpa %s265, 1
    %267 = vsyncpa [#allocation4], 1
    %s268 = scalar_lea.sflag [#allocation4], 1
    %269 = vsyncpa %s268, 1

</llo_original>
